<compile_context>
chip_gen: v6e
topology: v6e:2x2x1
jax: 0.10.0
libtpu: 0.0.40
codegen_flags: <defaults>
</compile_context>

<pallas_src>
import functools

import jax
import jax.numpy as jnp
from jax.experimental import pallas as pl
from jax.experimental.pallas import tpu as pltpu


def _round_up(x: int, m: int) -> int:
    return ((x + m - 1) // m) * m


def _cdiv(a: int, b: int) -> int:
    return -(-a // b)


def _phys_vmem_bytes() -> int:
    """Per-TensorCore VMEM capacity; conservative 64 MiB (v7x) fallback."""
    try:
        cap = int(getattr(pltpu.get_tpu_info(), "vmem_capacity_bytes", 0))
        if cap > 0:
            return cap
    except Exception:
        pass
    return 64 * 1024 * 1024


_PHYS_VMEM_BYTES = _phys_vmem_bytes()

# Resolved on first forward call: 1 if pipeline_mode=pl.Buffered(1) lowers on
# this jax/libtpu (single-buffer the grid-invariant weights), else 2.
_RESIDENT_BUFFERS = None


def mlp_kernel(x_ref, w1_ref, b1_ref, w2_ref, b2_ref, o_ref, acc_ref):
    """One (batch-tile, H-tile) grid step of fc2(relu(fc1(x)))."""
    k = pl.program_id(1)

    @pl.when(k == 0)
    def _init():
        acc_ref[...] = jnp.zeros_like(acc_ref)

    # fc1 partial: (TB, In_p) @ (In_p, TH) on the MXU (bf16 in, f32 acc),
    # bias + ReLU on the VPU in f32.
    h = jnp.dot(x_ref[...], w1_ref[...], preferred_element_type=jnp.float32)
    h = jnp.maximum(h + b1_ref[...], 0.0)

    # fc2 partial: (TB, TH) @ (TH, Out_p), accumulated over H tiles in f32.
    acc_ref[...] += jnp.dot(h.astype(jnp.bfloat16), w2_ref[...],
                            preferred_element_type=jnp.float32)

    @pl.when(k == pl.num_programs(1) - 1)
    def _finalize():
        o_ref[...] = (acc_ref[...] + b2_ref[...]).astype(o_ref.dtype)


def pack_mlp_params(w1, b1, w2, b2, *, lane: int = 128, h_block: int = 512):
    """One-time pad + bf16 cast of the weights (hoisted out of the call path).

    w1: (In, H), b1: (H,) or (1, H), w2: (H, Out), b2: (Out,) or (1, Out).
    `lane` may be set to 256 on v6e/v7x (2x256x256 MXU) for full MXU passes;
    128 is native on v5e and correct everywhere.
    """
    In, H = w1.shape
    Out = w2.shape[1]
    b1 = jnp.reshape(b1, (1, H))
    b2 = jnp.reshape(b2, (1, Out))

    In_p = _round_up(In, lane)
    Out_p = _round_up(Out, lane)
    # Balanced H tiling: n_h equal lane-aligned tiles of <= ~h_block columns.
    H_aligned = _round_up(H, lane)
    n_h = max(1, _cdiv(H_aligned, h_block))
    TH = _round_up(_cdiv(H_aligned, n_h), lane)
    H_p = n_h * TH

    w1_p = jnp.pad(w1, ((0, In_p - In), (0, H_p - H))).astype(jnp.bfloat16)
    b1_p = jnp.pad(b1, ((0, 0), (0, H_p - H))).astype(jnp.float32)
    w2_p = jnp.pad(w2, ((0, H_p - H), (0, Out_p - Out))).astype(jnp.bfloat16)
    b2_p = jnp.pad(b2, ((0, 0), (0, Out_p - Out))).astype(jnp.float32)
    return dict(w1=w1_p, b1=b1_p, w2=w2_p, b2=b2_p,
                h_tile=TH, out_features=Out)


@functools.partial(
    jax.jit,
    static_argnames=("out_features", "h_tile", "max_batch_tile",
                     "resident_buffers"))
def _mlp_forward(x, w1_p, b1_p, w2_p, b2_p, *, out_features, h_tile,
                 max_batch_tile, resident_buffers):
    B, In = x.shape
    In_p, H_p = w1_p.shape
    Out_p = w2_p.shape[1]
    out_dtype = x.dtype
    out_itemsize = jnp.dtype(out_dtype).itemsize

    TH = h_tile
    n_h = H_p // TH

    # Balanced batch tiling: n_bt tiles of ~equal size instead of a mostly-
    # padding tail tile; TB multiple of 16 for bf16 sublane packing.
    n_bt = max(1, _cdiv(B, max_batch_tile))
    TB = _round_up(_cdiv(B, n_bt), 16)
    B_p = n_bt * TB

    # Stream activations as bf16 (half the DMA traffic of f32 + in-kernel cast).
    x_p = jnp.pad(x.astype(jnp.bfloat16), ((0, B_p - B), (0, In_p - In)))

    # ---- VMEM budget (per TensorCore; megacore gives each core its own copy
    # of the resident weights). ----
    weights_resident = (n_h == 1)
    w_bufs = resident_buffers if weights_resident else 2
    resident = w_bufs * (In_p * TH * 2 + TH * Out_p * 2 + TH * 4) + Out_p * 4
    streamed = 2 * TB * In_p * 2 + 2 * TB * Out_p * out_itemsize
    scratch = TB * Out_p * 4 + TB * TH * 4          # acc scratch + live h tile
    need = resident + streamed + scratch
    vmem_cap = int(_PHYS_VMEM_BYTES * 0.85)         # headroom for compiler scratch
    vmem_bytes = int(min(vmem_cap, max(8 << 20, need + need // 4 + (1 << 20))))

    # ---- Scheduling hint for XLA (bf16 activations, weights re-streamed per
    # batch tile only when H is blocked). ----
    w_reads = 1 if weights_resident else n_bt
    flops = 2 * B_p * H_p * (In_p + Out_p)
    bytes_accessed = (B_p * In_p * 2 + B_p * Out_p * out_itemsize
                      + w_reads * (In_p * H_p * 2 + H_p * Out_p * 2)
                      + H_p * 4 + Out_p * 4)

    def _const_spec(shape):
        # Grid-invariant operand: single buffer when supported (halves VMEM).
        if resident_buffers == 1:
            return pl.BlockSpec(shape, lambda i, k: (0, 0),
                                pipeline_mode=pl.Buffered(1))
        return pl.BlockSpec(shape, lambda i, k: (0, 0))

    if weights_resident:
        w1_spec = _const_spec((In_p, TH))
        b1_spec = _const_spec((1, TH))
        w2_spec = _const_spec((TH, Out_p))
    else:
        # Stream H tiles (double-buffered) -> large hidden dims fit v7x VMEM.
        w1_spec = pl.BlockSpec((In_p, TH), lambda i, k: (0, k))
        b1_spec = pl.BlockSpec((1, TH), lambda i, k: (0, k))
        w2_spec = pl.BlockSpec((TH, Out_p), lambda i, k: (k, 0))
    b2_spec = _const_spec((1, Out_p))

    out_p = pl.pallas_call(
        mlp_kernel,
        out_shape=jax.ShapeDtypeStruct((B_p, Out_p), out_dtype),
        grid_spec=pltpu.PrefetchScalarGridSpec(
            num_scalar_prefetch=0,
            grid=(n_bt, n_h),
            in_specs=[
                pl.BlockSpec((TB, In_p), lambda i, k: (i, 0)),   # x tile
                w1_spec, b1_spec, w2_spec, b2_spec,
            ],
            out_specs=pl.BlockSpec((TB, Out_p), lambda i, k: (i, 0)),
            scratch_shapes=[pltpu.VMEM((TB, Out_p), jnp.float32)],
        ),
        compiler_params=pltpu.CompilerParams(
            dimension_semantics=("parallel", "arbitrary"),
            vmem_limit_bytes=vmem_bytes,
        ),
        cost_estimate=pl.CostEstimate(
            flops=flops, bytes_accessed=bytes_accessed, transcendentals=0),
    )(x_p, w1_p, b1_p, w2_p, b2_p)

    return out_p[:B, :out_features]


def mlp_forward(x, packed, *, max_batch_tile: int = 512):
    """MLP forward with pre-packed params (see pack_mlp_params)."""
    global _RESIDENT_BUFFERS
    args = (x, packed["w1"], packed["b1"], packed["w2"], packed["b2"])
    kwargs = dict(out_features=packed["out_features"],
                  h_tile=packed["h_tile"], max_batch_tile=max_batch_tile)
    if _RESIDENT_BUFFERS is None:
        try:
            out = jax.block_until_ready(
                _mlp_forward(*args, resident_buffers=1, **kwargs))
            _RESIDENT_BUFFERS = 1
            return out
        except Exception:
            # pl.Buffered(1) not supported on this stack -> default buffering.
            _RESIDENT_BUFFERS = 2
    return _mlp_forward(*args, resident_buffers=_RESIDENT_BUFFERS, **kwargs)


def init_linear_params(key, in_features, out_features, dtype=jnp.float32):
    """Deterministic init mimicking PyTorch nn.Linear default:
    U(-1/sqrt(in_features), 1/sqrt(in_features)) for weight and bias."""
    k_w, k_b = jax.random.split(key)
    bound = 1.0 / jnp.sqrt(jnp.asarray(in_features, dtype=jnp.float32))
    # Stored as (in_features, out_features) so the kernel computes x @ W.
    w = jax.random.uniform(k_w, (in_features, out_features), dtype,
                           minval=-bound, maxval=bound)
    b = jax.random.uniform(k_b, (1, out_features), dtype,
                           minval=-bound, maxval=bound)
    return w, b


def _bf16_reference(x, w1, b1, w2, b2):
    """Same bf16-input / f32-accumulate math as the kernel, in plain JAX."""
    h = jnp.dot(x.astype(jnp.bfloat16), w1.astype(jnp.bfloat16),
                preferred_element_type=jnp.float32) + b1
    h = jnp.maximum(h, 0.0)
    return jnp.dot(h.astype(jnp.bfloat16), w2.astype(jnp.bfloat16),
                   preferred_element_type=jnp.float32) + b2


if __name__ == "__main__":
    key = jax.random.PRNGKey(0)

    # --- Case 1: small shapes consistent with the module (single H tile). ---
    batch, input_size, hidden_size, output_size = 8, 32, 64, 16
    k_x, k_fc1, k_fc2, k2_x, k2_fc1, k2_fc2 = jax.random.split(key, 6)

    x = jax.random.normal(k_x, (batch, input_size), jnp.float32)
    w1, b1 = init_linear_params(k_fc1, input_size, hidden_size)
    w2, b2 = init_linear_params(k_fc2, hidden_size, output_size)

    packed = pack_mlp_params(w1, b1, w2, b2)      # one-time pad + bf16 cast
    out = jax.block_until_ready(mlp_forward(x, packed))
    assert out.shape == (batch, output_size)

    ref_bf16 = _bf16_reference(x, w1, b1, w2, b2)
    assert jnp.allclose(out, ref_bf16, atol=1e-3, rtol=1e-3), (
        jnp.max(jnp.abs(out - ref_bf16)))
    ref_f32 = jnp.maximum(x @ w1 + b1, 0.0) @ w2 + b2
    assert jnp.allclose(out, ref_f32, atol=5e-2, rtol=5e-2), (
        jnp.max(jnp.abs(out - ref_f32)))

    # --- Case 2: exercise the H-blocked accumulator path + tail batch tile. ---
    b2_, in2, hid2, out2 = 20, 96, 384, 48
    x2 = jax.random.normal(k2_x, (b2_, in2), jnp.float32)
    w1b, b1b = init_linear_params(k2_fc1, in2, hid2)
    w2b, b2b = init_linear_params(k2_fc2, hid2, out2)
    packed2 = pack_mlp_params(w1b, b1b, w2b, b2b, h_block=128)   # 3 H tiles
    o2 = jax.block_until_ready(mlp_forward(x2, packed2))
    assert o2.shape == (b2_, out2)
    ref2 = _bf16_reference(x2, w1b, b1b, w2b, b2b)
    assert jnp.allclose(o2, ref2, atol=2e-3, rtol=2e-3), (
        jnp.max(jnp.abs(o2 - ref2)))

    print("KERNEL_OK")
</pallas_src>

<mosaic_0001>
module attributes {stable_mosaic.version = 11 : i64} {
  func.func @mlp_kernel(%arg0: i32, %arg1: i32, %arg2: memref<16x128xbf16, #tpu.memory_space<vmem>>, %arg3: memref<128x128xbf16, #tpu.memory_space<vmem>>, %arg4: memref<1x128xf32, #tpu.memory_space<vmem>>, %arg5: memref<128x128xbf16, #tpu.memory_space<vmem>>, %arg6: memref<1x128xf32, #tpu.memory_space<vmem>>, %arg7: memref<16x128xf32, #tpu.memory_space<vmem>>, %arg8: memref<16x128xf32, #tpu.memory_space<vmem>>) attributes {dimension_semantics = [#tpu.dimension_semantics<parallel>, #tpu.dimension_semantics<arbitrary>], iteration_bounds = array<i64: 1, 1>, scalar_prefetch = 0 : i64, scratch_operands = 1 : i64, tpu.core_type = #tpu.core_type<tc>, window_params = [{transform_indices = @transform_0, window_bounds = array<i64: 16, 128>}, {pipeline_mode = #tpu.pipeline_mode<synchronous>, transform_indices = @transform_1, window_bounds = array<i64: 128, 128>}, {pipeline_mode = #tpu.pipeline_mode<synchronous>, transform_indices = @transform_2, window_bounds = array<i64: 1, 128>}, {pipeline_mode = #tpu.pipeline_mode<synchronous>, transform_indices = @transform_3, window_bounds = array<i64: 128, 128>}, {pipeline_mode = #tpu.pipeline_mode<synchronous>, transform_indices = @transform_4, window_bounds = array<i64: 1, 128>}, {transform_indices = @transform_5, window_bounds = array<i64: 16, 128>}]} {
    %c0_i32 = arith.constant 0 : i32
    %0 = arith.cmpi eq, %arg1, %c0_i32 : i32
    %1 = arith.extui %0 : i1 to i32
    %c0_i32_0 = arith.constant 0 : i32
    %2 = arith.cmpi ne, %1, %c0_i32_0 : i32
    scf.if %2 {
      %cst_16 = arith.constant 0.000000e+00 : f32
      %20 = vector.broadcast %cst_16 : f32 to vector<16x128xf32>
      %c0_17 = arith.constant 0 : index
      %c0_18 = arith.constant 0 : index
      %21 = vector.load %arg8[%c0_17, %c0_18] : memref<16x128xf32, #tpu.memory_space<vmem>>, vector<16x128xf32>
      tpu.vector_store %arg8[%c0_17, %c0_18], %20 {strides = array<i32>} : memref<16x128xf32, #tpu.memory_space<vmem>>, vector<16x128xf32>,
    } else {
    }
    %c0 = arith.constant 0 : index
    %c0_1 = arith.constant 0 : index
    %3 = vector.load %arg2[%c0, %c0_1] : memref<16x128xbf16, #tpu.memory_space<vmem>>, vector<16x128xbf16>
    %c0_2 = arith.constant 0 : index
    %c0_3 = arith.constant 0 : index
    %4 = vector.load %arg3[%c0_2, %c0_3] : memref<128x128xbf16, #tpu.memory_space<vmem>>, vector<128x128xbf16>
    %cst = arith.constant dense<0.000000e+00> : vector<16x128xf32>
    %5 = tpu.matmul %3, %4, %cst {dimension_numbers = #tpu.dot_dimension_numbers<[1], [0], [0], [1], [0, 0, 1, 1], [], []>} : vector<16x128xbf16>, vector<128x128xbf16>, vector<16x128xf32> -> vector<16x128xf32>
    %c0_4 = arith.constant 0 : index
    %c0_5 = arith.constant 0 : index
    %6 = vector.load %arg4[%c0_4, %c0_5] : memref<1x128xf32, #tpu.memory_space<vmem>>, vector<1x128xf32>
    %7 = vector.broadcast %6 : vector<1x128xf32> to vector<16x128xf32>
    %8 = arith.addf %5, %7 : vector<16x128xf32>
    %cst_6 = arith.constant 0.000000e+00 : f32
    %9 = vector.broadcast %cst_6 : f32 to vector<16x128xf32>
    %10 = arith.maximumf %8, %9 : vector<16x128xf32>
    %c0_7 = arith.constant 0 : index
    %c0_8 = arith.constant 0 : index
    %11 = vector.load %arg8[%c0_7, %c0_8] : memref<16x128xf32, #tpu.memory_space<vmem>>, vector<16x128xf32>
    %12 = arith.truncf %10 : vector<16x128xf32> to vector<16x128xbf16>
    %c0_9 = arith.constant 0 : index
    %c0_10 = arith.constant 0 : index
    %13 = vector.load %arg5[%c0_9, %c0_10] : memref<128x128xbf16, #tpu.memory_space<vmem>>, vector<128x128xbf16>
    %cst_11 = arith.constant dense<0.000000e+00> : vector<16x128xf32>
    %14 = tpu.matmul %12, %13, %cst_11 {dimension_numbers = #tpu.dot_dimension_numbers<[1], [0], [0], [1], [0, 0, 1, 1], [], []>} : vector<16x128xbf16>, vector<128x128xbf16>, vector<16x128xf32> -> vector<16x128xf32>
    %15 = arith.addf %11, %14 : vector<16x128xf32>
    %c0_12 = arith.constant 0 : index
    %c0_13 = arith.constant 0 : index
    %16 = vector.load %arg8[%c0_12, %c0_13] : memref<16x128xf32, #tpu.memory_space<vmem>>, vector<16x128xf32>
    tpu.vector_store %arg8[%c0_12, %c0_13], %15 {strides = array<i32>} : memref<16x128xf32, #tpu.memory_space<vmem>>, vector<16x128xf32>,
    %c0_i32_14 = arith.constant 0 : i32
    %17 = arith.cmpi eq, %arg1, %c0_i32_14 : i32
    %18 = arith.extui %17 : i1 to i32
    %c0_i32_15 = arith.constant 0 : i32
    %19 = arith.cmpi ne, %18, %c0_i32_15 : i32
    scf.if %19 {
      %c0_16 = arith.constant 0 : index
      %c0_17 = arith.constant 0 : index
      %20 = vector.load %arg8[%c0_16, %c0_17] : memref<16x128xf32, #tpu.memory_space<vmem>>, vector<16x128xf32>
      %c0_18 = arith.constant 0 : index
      %c0_19 = arith.constant 0 : index
      %21 = vector.load %arg6[%c0_18, %c0_19] : memref<1x128xf32, #tpu.memory_space<vmem>>, vector<1x128xf32>
      %22 = vector.broadcast %21 : vector<1x128xf32> to vector<16x128xf32>
      %23 = arith.addf %20, %22 : vector<16x128xf32>
      %c0_20 = arith.constant 0 : index
      %c0_21 = arith.constant 0 : index
      %24 = vector.load %arg7[%c0_20, %c0_21] : memref<16x128xf32, #tpu.memory_space<vmem>>, vector<16x128xf32>
      tpu.vector_store %arg7[%c0_20, %c0_21], %23 {strides = array<i32>} : memref<16x128xf32, #tpu.memory_space<vmem>>, vector<16x128xf32>,
    } else {
    }
    return
  }
  func.func @transform_0(%arg0: i32, %arg1: i32) -> (i32, i32) {
    %c0_i32 = arith.constant 0 : i32
    %c0_i32_0 = arith.constant 0 : i32
    return %arg0, %c0_i32 : i32, i32
  }
  func.func @transform_1(%arg0: i32, %arg1: i32) -> (i32, i32) {
    %c0_i32 = arith.constant 0 : i32
    %c0_i32_0 = arith.constant 0 : i32
    %c0_i32_1 = arith.constant 0 : i32
    return %c0_i32, %c0_i32_0 : i32, i32
  }
  func.func @transform_2(%arg0: i32, %arg1: i32) -> (i32, i32) {
    %c0_i32 = arith.constant 0 : i32
    %c0_i32_0 = arith.constant 0 : i32
    %c0_i32_1 = arith.constant 0 : i32
    return %c0_i32, %c0_i32_0 : i32, i32
  }
  func.func @transform_3(%arg0: i32, %arg1: i32) -> (i32, i32) {
    %c0_i32 = arith.constant 0 : i32
    %c0_i32_0 = arith.constant 0 : i32
    %c0_i32_1 = arith.constant 0 : i32
    return %c0_i32, %c0_i32_0 : i32, i32
  }
  func.func @transform_4(%arg0: i32, %arg1: i32) -> (i32, i32) {
    %c0_i32 = arith.constant 0 : i32
    %c0_i32_0 = arith.constant 0 : i32
    %c0_i32_1 = arith.constant 0 : i32
    return %c0_i32, %c0_i32_0 : i32, i32
  }
  func.func @transform_5(%arg0: i32, %arg1: i32) -> (i32, i32) {
    %c0_i32 = arith.constant 0 : i32
    %c0_i32_0 = arith.constant 0 : i32
    return %arg0, %c0_i32 : i32, i32
  }
}

module attributes {stable_mosaic.version = 11 : i64} {
  func.func @mlp_kernel(%arg0: i32, %arg1: i32, %arg2: memref<16x128xbf16, #tpu.memory_space<vmem>>, %arg3: memref<128x128xbf16, #tpu.memory_space<vmem>>, %arg4: memref<1x128xf32, #tpu.memory_space<vmem>>, %arg5: memref<128x128xbf16, #tpu.memory_space<vmem>>, %arg6: memref<1x128xf32, #tpu.memory_space<vmem>>, %arg7: memref<16x128xf32, #tpu.memory_space<vmem>>, %arg8: memref<16x128xf32, #tpu.memory_space<vmem>>) attributes {dimension_semantics = [#tpu.dimension_semantics<parallel>, #tpu.dimension_semantics<arbitrary>], iteration_bounds = array<i64: 1, 1>, scalar_prefetch = 0 : i64, scratch_operands = 1 : i64, tpu.core_type = #tpu.core_type<tc>, window_params = [{transform_indices = @transform_0, window_bounds = array<i64: 16, 128>}, {pipeline_mode = #tpu.pipeline_mode<synchronous>, transform_indices = @transform_1, window_bounds = array<i64: 128, 128>}, {pipeline_mode = #tpu.pipeline_mode<synchronous>, transform_indices = @transform_2, window_bounds = array<i64: 1, 128>}, {pipeline_mode = #tpu.pipeline_mode<synchronous>, transform_indices = @transform_3, window_bounds = array<i64: 128, 128>}, {pipeline_mode = #tpu.pipeline_mode<synchronous>, transform_indices = @transform_4, window_bounds = array<i64: 1, 128>}, {transform_indices = @transform_5, window_bounds = array<i64: 16, 128>}]} {
    %c0_i32 = arith.constant 0 : i32
    %0 = arith.cmpi eq, %arg1, %c0_i32 : i32
    %1 = arith.extui %0 : i1 to i32
    %c0_i32_0 = arith.constant 0 : i32
    %2 = arith.cmpi ne, %1, %c0_i32_0 : i32
    scf.if %2 {
      %cst_16 = arith.constant 0.000000e+00 : f32
      %20 = vector.broadcast %cst_16 : f32 to vector<16x128xf32>
      %c0_17 = arith.constant 0 : index
      %c0_18 = arith.constant 0 : index
      %21 = vector.load %arg8[%c0_17, %c0_18] : memref<16x128xf32, #tpu.memory_space<vmem>>, vector<16x128xf32>
      tpu.vector_store %arg8[%c0_17, %c0_18], %20 {strides = array<i32>} : memref<16x128xf32, #tpu.memory_space<vmem>>, vector<16x128xf32>,
    } else {
    }
    %c0 = arith.constant 0 : index
    %c0_1 = arith.constant 0 : index
    %3 = vector.load %arg2[%c0, %c0_1] : memref<16x128xbf16, #tpu.memory_space<vmem>>, vector<16x128xbf16>
    %c0_2 = arith.constant 0 : index
    %c0_3 = arith.constant 0 : index
    %4 = vector.load %arg3[%c0_2, %c0_3] : memref<128x128xbf16, #tpu.memory_space<vmem>>, vector<128x128xbf16>
    %cst = arith.constant dense<0.000000e+00> : vector<16x128xf32>
    %5 = tpu.matmul %3, %4, %cst {dimension_numbers = #tpu.dot_dimension_numbers<[1], [0], [0], [1], [0, 0, 1, 1], [], []>} : vector<16x128xbf16>, vector<128x128xbf16>, vector<16x128xf32> -> vector<16x128xf32>
    %c0_4 = arith.constant 0 : index
    %c0_5 = arith.constant 0 : index
    %6 = vector.load %arg4[%c0_4, %c0_5] : memref<1x128xf32, #tpu.memory_space<vmem>>, vector<1x128xf32>
    %7 = vector.broadcast %6 : vector<1x128xf32> to vector<16x128xf32>
    %8 = arith.addf %5, %7 : vector<16x128xf32>
    %cst_6 = arith.constant 0.000000e+00 : f32
    %9 = vector.broadcast %cst_6 : f32 to vector<16x128xf32>
    %10 = arith.maximumf %8, %9 : vector<16x128xf32>
    %c0_7 = arith.constant 0 : index
    %c0_8 = arith.constant 0 : index
    %11 = vector.load %arg8[%c0_7, %c0_8] : memref<16x128xf32, #tpu.memory_space<vmem>>, vector<16x128xf32>
    %12 = arith.truncf %10 : vector<16x128xf32> to vector<16x128xbf16>
    %c0_9 = arith.constant 0 : index
    %c0_10 = arith.constant 0 : index
    %13 = vector.load %arg5[%c0_9, %c0_10] : memref<128x128xbf16, #tpu.memory_space<vmem>>, vector<128x128xbf16>
    %cst_11 = arith.constant dense<0.000000e+00> : vector<16x128xf32>
    %14 = tpu.matmul %12, %13, %cst_11 {dimension_numbers = #tpu.dot_dimension_numbers<[1], [0], [0], [1], [0, 0, 1, 1], [], []>} : vector<16x128xbf16>, vector<128x128xbf16>, vector<16x128xf32> -> vector<16x128xf32>
    %15 = arith.addf %11, %14 : vector<16x128xf32>
    %c0_12 = arith.constant 0 : index
    %c0_13 = arith.constant 0 : index
    %16 = vector.load %arg8[%c0_12, %c0_13] : memref<16x128xf32, #tpu.memory_space<vmem>>, vector<16x128xf32>
    tpu.vector_store %arg8[%c0_12, %c0_13], %15 {strides = array<i32>} : memref<16x128xf32, #tpu.memory_space<vmem>>, vector<16x128xf32>,
    %c0_i32_14 = arith.constant 0 : i32
    %17 = arith.cmpi eq, %arg1, %c0_i32_14 : i32
    %18 = arith.extui %17 : i1 to i32
    %c0_i32_15 = arith.constant 0 : i32
    %19 = arith.cmpi ne, %18, %c0_i32_15 : i32
    scf.if %19 {
      %c0_16 = arith.constant 0 : index
      %c0_17 = arith.constant 0 : index
      %20 = vector.load %arg8[%c0_16, %c0_17] : memref<16x128xf32, #tpu.memory_space<vmem>>, vector<16x128xf32>
      %c0_18 = arith.constant 0 : index
      %c0_19 = arith.constant 0 : index
      %21 = vector.load %arg6[%c0_18, %c0_19] : memref<1x128xf32, #tpu.memory_space<vmem>>, vector<1x128xf32>
      %22 = vector.broadcast %21 : vector<1x128xf32> to vector<16x128xf32>
      %23 = arith.addf %20, %22 : vector<16x128xf32>
      %c0_20 = arith.constant 0 : index
      %c0_21 = arith.constant 0 : index
      %24 = vector.load %arg7[%c0_20, %c0_21] : memref<16x128xf32, #tpu.memory_space<vmem>>, vector<16x128xf32>
      tpu.vector_store %arg7[%c0_20, %c0_21], %23 {strides = array<i32>} : memref<16x128xf32, #tpu.memory_space<vmem>>, vector<16x128xf32>,
    } else {
    }
    return
  }
  func.func @transform_0(%arg0: i32, %arg1: i32) -> (i32, i32) {
    %c0_i32 = arith.constant 0 : i32
    %c0_i32_0 = arith.constant 0 : i32
    return %arg0, %c0_i32 : i32, i32
  }
  func.func @transform_1(%arg0: i32, %arg1: i32) -> (i32, i32) {
    %c0_i32 = arith.constant 0 : i32
    %c0_i32_0 = arith.constant 0 : i32
    %c0_i32_1 = arith.constant 0 : i32
    return %c0_i32, %c0_i32_0 : i32, i32
  }
  func.func @transform_2(%arg0: i32, %arg1: i32) -> (i32, i32) {
    %c0_i32 = arith.constant 0 : i32
    %c0_i32_0 = arith.constant 0 : i32
    %c0_i32_1 = arith.constant 0 : i32
    return %c0_i32, %c0_i32_0 : i32, i32
  }
  func.func @transform_3(%arg0: i32, %arg1: i32) -> (i32, i32) {
    %c0_i32 = arith.constant 0 : i32
    %c0_i32_0 = arith.constant 0 : i32
    %c0_i32_1 = arith.constant 0 : i32
    return %c0_i32, %c0_i32_0 : i32, i32
  }
  func.func @transform_4(%arg0: i32, %arg1: i32) -> (i32, i32) {
    %c0_i32 = arith.constant 0 : i32
    %c0_i32_0 = arith.constant 0 : i32
    %c0_i32_1 = arith.constant 0 : i32
    return %c0_i32, %c0_i32_0 : i32, i32
  }
  func.func @transform_5(%arg0: i32, %arg1: i32) -> (i32, i32) {
    %c0_i32 = arith.constant 0 : i32
    %c0_i32_0 = arith.constant 0 : i32
    return %arg0, %c0_i32 : i32, i32
  }
}

</mosaic_0001>

<llo_original>
// kernel: _mlp_forward.1
$region0: #{_mlp_forward.1}
  #allocation0 [shape = 'u32[]', space=smem, size = 0x4, offset = 0x4, fixed_abs, tag = 'smem constant byte address 0x4 - core index']
  #allocation1 [shape = 'u32[144,128]{1,0:T(1,128)}', space=vmem, size = 0x12000, scoped, tag = 'internal scratch']
  #allocation2 [shape = 'f32[16,128]{1,0:T(8,128)}', space=vmem, size = 0x2000, scoped, tag = 'scratch operand']
  %s0 = inlined_call_operand.vmem [shape: bf16[16,128], index: 0, kind: input, shape index: {}]
  %s1 = inlined_call_operand.hbm [shape: bf16[128,128], index: 1, kind: input, shape index: {}]
  %s2 = inlined_call_operand.vmem [shape: f32[1,128], index: 2, kind: input, shape index: {}]
  %s3 = inlined_call_operand.hbm [shape: bf16[128,128], index: 3, kind: input, shape index: {}]
  %s4 = inlined_call_operand.vmem [shape: f32[1,128], index: 4, kind: input, shape index: {}]
  %s5 = inlined_call_operand.vmem [shape: f32[16,128], index: 5, kind: output, shape index: {}]
  %s6 = sld [smem:[#allocation0]]
  $region46: #{_mlp_forward.1} parent=0
    _
  %s8 = ssub.s32 1, %s6
  %s9 = scalar_select 0, %s8, %s6
  $region1: #{_mlp_forward.1} parent=0
    #allocation3 [shape = 'u8[32768]{0}', space=vmem, size = 0x8000, scoped, tag = 'input window, operand 1, single buffered']
    #allocation4 [shape = 's32[1]{0}', space=sflag, size = 0x4, scoped, tag = 'scoped memory for _mlp_forward.1']
    #allocation5 [shape = 'u8[32768]{0}', space=vmem, size = 0x8000, scoped, tag = 'input window, operand 3, single buffered']
    #allocation6 [shape = 's32[1]{0}', space=sflag, size = 0x4, scoped, tag = 'scoped memory for _mlp_forward.1']
    %10 = vsyncpa [#allocation4], 0
    %11 = vsyncpa [#allocation6], 0
    // Predicated region
    $region2: #{_mlp_forward.1} parent=1 // pred_check
      _
    $region3: #{_mlp_forward.1} parent=1 // pred_check_branch
      %13 = sbr.rel (0) target = $region5
    $region4: #{_mlp_forward.1} parent=1 // pred_region
      _
    $region5: #{_mlp_forward.1} parent=1 // pred_fallthru
      _
    // Predicated region
    $region6: #{_mlp_forward.1} parent=1 // pred_check
      _
    $region7: #{_mlp_forward.1} parent=1 // pred_check_branch
      %15 = sbr.rel (0) target = $region9
    $region8: #{_mlp_forward.1} parent=1 // pred_region
      %s17 = ssub.s32 1024, 1024
      %18 = vsyncadd [#allocation4], %s17
      %s19 = sshll.u32 [#allocation3], 4
      %s20 = int_to_ptr.vmem [resolvable:$true] %s19
      %25 = dma.hbm_to_vmem [thread:$0]  %s1, 1024, %s20, [#allocation4], 64, 64, 4
    $region9: #{_mlp_forward.1} parent=1 // pred_fallthru
      _
    // Predicated region
    $region10: #{_mlp_forward.1} parent=1 // pred_check
      _
    $region11: #{_mlp_forward.1} parent=1 // pred_check_branch
      %27 = sbr.rel (0) target = $region13
    $region12: #{_mlp_forward.1} parent=1 // pred_region
      _
    $region13: #{_mlp_forward.1} parent=1 // pred_fallthru
      _
    // Predicated region
    $region14: #{_mlp_forward.1} parent=1 // pred_check
      _
    $region15: #{_mlp_forward.1} parent=1 // pred_check_branch
      %29 = sbr.rel (0) target = $region17
    $region16: #{_mlp_forward.1} parent=1 // pred_region
      %s31 = ssub.s32 1024, 1024
      %32 = vsyncadd [#allocation6], %s31
      %s33 = sshll.u32 [#allocation5], 4
      %s34 = int_to_ptr.vmem [resolvable:$true] %s33
      %39 = dma.hbm_to_vmem [thread:$0]  %s3, 1024, %s34, [#allocation6], 64, 64, 4
    $region17: #{_mlp_forward.1} parent=1 // pred_fallthru
      _
    // Predicated region
    $region18: #{_mlp_forward.1} parent=1 // pred_check
      _
    $region19: #{_mlp_forward.1} parent=1 // pred_check_branch
      %41 = sbr.rel (0) target = $region21
    $region20: #{_mlp_forward.1} parent=1 // pred_region
      _
    $region21: #{_mlp_forward.1} parent=1 // pred_fallthru
      _
    // Predicated region
    $region22: #{_mlp_forward.1} parent=1 // pred_check
      _
    $region23: #{_mlp_forward.1} parent=1 // pred_check_branch
      %43 = sbr.rel (0) target = $region25
    $region24: #{_mlp_forward.1} parent=1 // pred_region
      %44 = dma.done [#allocation4], 1024
    $region25: #{_mlp_forward.1} parent=1 // pred_fallthru
      _
    // Predicated region
    $region26: #{_mlp_forward.1} parent=1 // pred_check
      _
    $region27: #{_mlp_forward.1} parent=1 // pred_check_branch
      %46 = sbr.rel (0) target = $region29
    $region28: #{_mlp_forward.1} parent=1 // pred_region
      %47 = dma.done [#allocation6], 1024
    $region29: #{_mlp_forward.1} parent=1 // pred_fallthru
      _
    %p49 = scmp.eq.s32.totalorder 0, 0
    // Predicated region
    $region30: #{_mlp_forward.1} parent=1 // pred_check
      %p50 = pneg %p49
    $region31: #{_mlp_forward.1} parent=1 // pred_check_branch
      %52 = sbr.rel (%p50) target = $region33
    $region32: #{_mlp_forward.1} parent=1 // pred_region
      %53 = vst [vmem:[#allocation2] sm:$0xff] 0.0
      %54 = vst [vmem:[#allocation2 + $0x8] sm:$0xff] 0.0
    $region33: #{_mlp_forward.1} parent=1 // pred_fallthru
      _
    %v55 = vld [vmem:[%s0] sm:$0xf]
    %v56 = vld [vmem:[%s0 + $0x4] sm:$0xf]
    %v57 = vld [vmem:[#allocation3] sm:$0xf]
    %v58 = vld [vmem:[#allocation3 + $0x4] sm:$0xf]
    %v59 = vld [vmem:[#allocation3 + $0x8] sm:$0xf]
    %v60 = vld [vmem:[#allocation3 + $0xc] sm:$0xf]
    %v61 = vld [vmem:[#allocation3 + $0x10] sm:$0xf]
    %v62 = vld [vmem:[#allocation3 + $0x14] sm:$0xf]
    %v63 = vld [vmem:[#allocation3 + $0x18] sm:$0xf]
    %v64 = vld [vmem:[#allocation3 + $0x1c] sm:$0xf]
    %v65 = vld [vmem:[#allocation3 + $0x20] sm:$0xf]
    %v66 = vld [vmem:[#allocation3 + $0x24] sm:$0xf]
    %v67 = vld [vmem:[#allocation3 + $0x28] sm:$0xf]
    %v68 = vld [vmem:[#allocation3 + $0x2c] sm:$0xf]
    %v69 = vld [vmem:[#allocation3 + $0x30] sm:$0xf]
    %v70 = vld [vmem:[#allocation3 + $0x34] sm:$0xf]
    %v71 = vld [vmem:[#allocation3 + $0x38] sm:$0xf]
    %v72 = vld [vmem:[#allocation3 + $0x3c] sm:$0xf]
    %v73 = vld [vmem:[%s2] sm:$0x1]
    %v75 = vlaneseq
    %v76 = vshrl.u32 %v75, 7
    %v77 = vsub.s32 0, %v76
    %v78 = vrot.slane %v73, %v77
    %v82 = vunpack.c.l.b16 %v55
    %v83 = vunpack.c.l.b16 %v56
    %v84 = vpack.c.b16 %v83, %v82
    %v102 = vunpack.c.l.b16 %v57
    %v103 = vunpack.c.l.b16 %v58
    %v104 = vunpack.c.l.b16 %v59
    %v105 = vunpack.c.l.b16 %v60
    %v106 = vunpack.c.l.b16 %v61
    %v107 = vunpack.c.l.b16 %v62
    %v108 = vunpack.c.l.b16 %v63
    %v109 = vunpack.c.l.b16 %v64
    %v110 = vunpack.c.l.b16 %v65
    %v111 = vunpack.c.l.b16 %v66
    %v112 = vunpack.c.l.b16 %v67
    %v113 = vunpack.c.l.b16 %v68
    %v114 = vunpack.c.l.b16 %v69
    %v115 = vunpack.c.l.b16 %v70
    %v116 = vunpack.c.l.b16 %v71
    %v117 = vunpack.c.l.b16 %v72
    %v118 = vpack.c.b16 %v103, %v102
    %v119 = vpack.c.b16 %v105, %v104
    %v120 = vpack.c.b16 %v107, %v106
    %v121 = vpack.c.b16 %v109, %v108
    %v122 = vpack.c.b16 %v111, %v110
    %v123 = vpack.c.b16 %v113, %v112
    %v124 = vpack.c.b16 %v115, %v114
    %v125 = vpack.c.b16 %v117, %v116
    %134 = vmatprep.subr.bf16.mxu0 0
    %135 = vmatpush1.bf16.msra.mxu0 %v125
    %136 = vmatprep.subr.bf16.mxu0 0
    %137 = vmatpush1.bf16.msra.mxu0 %v124
    %138 = vmatprep.subr.bf16.mxu0 0
    %139 = vmatpush1.bf16.msra.mxu0 %v123
    %140 = vmatprep.subr.bf16.mxu0 0
    %141 = vmatpush1.bf16.msra.mxu0 %v122
    %142 = vmatprep.subr.bf16.mxu0 0
    %143 = vmatpush1.bf16.msra.mxu0 %v121
    %144 = vmatprep.subr.bf16.mxu0 0
    %145 = vmatpush1.bf16.msra.mxu0 %v120
    %146 = vmatprep.subr.bf16.mxu0 0
    %147 = vmatpush1.bf16.msra.mxu0 %v119
    %148 = vmatprep.subr.bf16.mxu0 0
    %149 = vmatpush1.bf16.msra.mxu0 %v118
    %150 = vmatprep.subr.bf16.mxu0 0
    %151 = vmatpush2.bf16.msra.mxu0 0
    %152 = vmatprep.subr.bf16.mxu0 0
    %153 = vmatpush2.bf16.msra.mxu0 0
    %154 = vmatprep.subr.bf16.mxu0 0
    %155 = vmatpush2.bf16.msra.mxu0 0
    %156 = vmatprep.subr.bf16.mxu0 0
    %157 = vmatpush2.bf16.msra.mxu0 0
    %158 = vmatprep.subr.bf16.mxu0 0
    %159 = vmatpush2.bf16.msra.mxu0 0
    %160 = vmatprep.subr.bf16.mxu0 0
    %161 = vmatpush2.bf16.msra.mxu0 0
    %162 = vmatprep.subr.bf16.mxu0 0
    %163 = vmatpush2.bf16.msra.mxu0 0
    %164 = vmatprep.subr.bf16.mxu0 0
    %165 = vmatpush2.bf16.msra.mxu0 0
    %166 = vmatprep.mubr.bf16.mxu0 0
    %167 = vmatmul.mubr.bf16.gmra.mxu0 %v84
    %v168 = vpop.f32.mrf.mxu0
    %v169 = vadd.f32 %v78, %v168
    %v170 = vpop.f32.mrf.mxu0
    %v171 = vpop.f32.mrf.mxu0
    %v172 = vadd.f32 %v78, %v171
    %v173 = vpop.f32.mrf.mxu0
    %174 = vdwg.mxu0
    %v175 = vmax.f32 %v169, 0.0
    %v176 = vmax.f32 %v172, 0.0
    %v177 = vld [vmem:[#allocation2] sm:$0xff]
    %v178 = vld [vmem:[#allocation2 + $0x8] sm:$0xff]
    %v179 = vpack.c.bf16 %v176, %v175
    %v180 = vld [vmem:[#allocation5] sm:$0xf]
    %v181 = vld [vmem:[#allocation5 + $0x4] sm:$0xf]
    %v182 = vld [vmem:[#allocation5 + $0x8] sm:$0xf]
    %v183 = vld [vmem:[#allocation5 + $0xc] sm:$0xf]
    %v184 = vld [vmem:[#allocation5 + $0x10] sm:$0xf]
    %v185 = vld [vmem:[#allocation5 + $0x14] sm:$0xf]
    %v186 = vld [vmem:[#allocation5 + $0x18] sm:$0xf]
    %v187 = vld [vmem:[#allocation5 + $0x1c] sm:$0xf]
    %v188 = vld [vmem:[#allocation5 + $0x20] sm:$0xf]
    %v189 = vld [vmem:[#allocation5 + $0x24] sm:$0xf]
    %v190 = vld [vmem:[#allocation5 + $0x28] sm:$0xf]
    %v191 = vld [vmem:[#allocation5 + $0x2c] sm:$0xf]
    %v192 = vld [vmem:[#allocation5 + $0x30] sm:$0xf]
    %v193 = vld [vmem:[#allocation5 + $0x34] sm:$0xf]
    %v194 = vld [vmem:[#allocation5 + $0x38] sm:$0xf]
    %v195 = vld [vmem:[#allocation5 + $0x3c] sm:$0xf]
    %v212 = vunpack.c.l.b16 %v180
    %v213 = vunpack.c.l.b16 %v181
    %v214 = vunpack.c.l.b16 %v182
    %v215 = vunpack.c.l.b16 %v183
    %v216 = vunpack.c.l.b16 %v184
    %v217 = vunpack.c.l.b16 %v185
    %v218 = vunpack.c.l.b16 %v186
    %v219 = vunpack.c.l.b16 %v187
    %v220 = vunpack.c.l.b16 %v188
    %v221 = vunpack.c.l.b16 %v189
    %v222 = vunpack.c.l.b16 %v190
    %v223 = vunpack.c.l.b16 %v191
    %v224 = vunpack.c.l.b16 %v192
    %v225 = vunpack.c.l.b16 %v193
    %v226 = vunpack.c.l.b16 %v194
    %v227 = vunpack.c.l.b16 %v195
    %v228 = vpack.c.b16 %v213, %v212
    %v229 = vpack.c.b16 %v215, %v214
    %v230 = vpack.c.b16 %v217, %v216
    %v231 = vpack.c.b16 %v219, %v218
    %v232 = vpack.c.b16 %v221, %v220
    %v233 = vpack.c.b16 %v223, %v222
    %v234 = vpack.c.b16 %v225, %v224
    %v235 = vpack.c.b16 %v227, %v226
    %244 = vmatprep.subr.bf16.mxu0 0
    %245 = vmatpush1.bf16.msra.mxu0 %v235
    %246 = vmatprep.subr.bf16.mxu0 0
    %247 = vmatpush1.bf16.msra.mxu0 %v234
    %248 = vmatprep.subr.bf16.mxu0 0
    %249 = vmatpush1.bf16.msra.mxu0 %v233
    %250 = vmatprep.subr.bf16.mxu0 0
    %251 = vmatpush1.bf16.msra.mxu0 %v232
    %252 = vmatprep.subr.bf16.mxu0 0
    %253 = vmatpush1.bf16.msra.mxu0 %v231
    %254 = vmatprep.subr.bf16.mxu0 0
    %255 = vmatpush1.bf16.msra.mxu0 %v230
    %256 = vmatprep.subr.bf16.mxu0 0
    %257 = vmatpush1.bf16.msra.mxu0 %v229
    %258 = vmatprep.subr.bf16.mxu0 0
    %259 = vmatpush1.bf16.msra.mxu0 %v228
    %260 = vmatprep.subr.bf16.mxu0 0
    %261 = vmatpush2.bf16.msra.mxu0 0
    %262 = vmatprep.subr.bf16.mxu0 0
    %263 = vmatpush2.bf16.msra.mxu0 0
    %264 = vmatprep.subr.bf16.mxu0 0
    %265 = vmatpush2.bf16.msra.mxu0 0
    %266 = vmatprep.subr.bf16.mxu0 0
    %267 = vmatpush2.bf16.msra.mxu0 0
    %268 = vmatprep.subr.bf16.mxu0 0
    %269 = vmatpush2.bf16.msra.mxu0 0
    %270 = vmatprep.subr.bf16.mxu0 0
    %271 = vmatpush2.bf16.msra.mxu0 0
    %272 = vmatprep.subr.bf16.mxu0 0
    %273 = vmatpush2.bf16.msra.mxu0 0
    %274 = vmatprep.subr.bf16.mxu0 0
    %275 = vmatpush2.bf16.msra.mxu0 0
    %276 = vmatprep.mubr.bf16.mxu0 0
    %277 = vmatmul.mubr.bf16.gmra.mxu0 %v179
    %v278 = vpop.f32.mrf.mxu0
    %v279 = vadd.f32 0.0, %v278
    %v280 = vpop.f32.mrf.mxu0
    %v281 = vpop.f32.mrf.mxu0
    %v282 = vadd.f32 0.0, %v281
    %v283 = vpop.f32.mrf.mxu0
    %284 = vdwg.mxu0
    %v285 = vadd.f32 %v177, %v279
    %v286 = vadd.f32 %v178, %v282
    %287 = vst [vmem:[#allocation2] sm:$0xff] %v285
    %288 = vst [vmem:[#allocation2 + $0x8] sm:$0xff] %v286
    // Predicated region
    $region34: #{_mlp_forward.1} parent=1 // pred_check
      %p289 = pneg %p49
    $region35: #{_mlp_forward.1} parent=1 // pred_check_branch
      %291 = sbr.rel (%p289) target = $region37
    $region36: #{_mlp_forward.1} parent=1 // pred_region
      %v292 = vld [vmem:[#allocation2] sm:$0xff]
      %v293 = vld [vmem:[#allocation2 + $0x8] sm:$0xff]
      %v294 = vld [vmem:[%s4] sm:$0x1]
      %v296 = vlaneseq
      %v297 = vshrl.u32 %v296, 7
      %v298 = vsub.s32 0, %v297
      %v299 = vrot.slane %v294, %v298
      %v301 = vadd.f32 %v292, %v299
      %v302 = vadd.f32 %v293, %v299
      %303 = vst [vmem:[%s5] sm:$0xff] %v301
      %304 = vst [vmem:[%s5 + $0x8] sm:$0xff] %v302
    $region37: #{_mlp_forward.1} parent=1 // pred_fallthru
      _
    // Predicated region
    $region38: #{_mlp_forward.1} parent=1 // pred_check
      _
    $region39: #{_mlp_forward.1} parent=1 // pred_check_branch
      %306 = sbr.rel (0) target = $region41
    $region40: #{_mlp_forward.1} parent=1 // pred_region
      _
    $region41: #{_mlp_forward.1} parent=1 // pred_fallthru
      _
    // Predicated region
    $region42: #{_mlp_forward.1} parent=1 // pred_check
      _
    $region43: #{_mlp_forward.1} parent=1 // pred_check_branch
      %308 = sbr.rel (0) target = $region45
    $region44: #{_mlp_forward.1} parent=1 // pred_region
      _
    $region45: #{_mlp_forward.1} parent=1 // pred_fallthru
      _
    %309 = vsyncpa [#allocation4], 1
    %310 = vsyncpa [#allocation6], 1

// kernel: _mlp_forward.1
$region0: #{_mlp_forward.1}
  #allocation0 [shape = 'u32[]', space=smem, size = 0x4, offset = 0x4, fixed_abs, tag = 'smem constant byte address 0x4 - core index']
  #allocation1 [shape = 'u32[144,128]{1,0:T(1,128)}', space=vmem, size = 0x12000, scoped, tag = 'internal scratch']
  #allocation2 [shape = 'f32[16,128]{1,0:T(8,128)}', space=vmem, size = 0x2000, scoped, tag = 'scratch operand']
  %s0 = inlined_call_operand.vmem [shape: bf16[16,128], index: 0, kind: input, shape index: {}]
  %s1 = inlined_call_operand.hbm [shape: bf16[128,128], index: 1, kind: input, shape index: {}]
  %s2 = inlined_call_operand.vmem [shape: f32[1,128], index: 2, kind: input, shape index: {}]
  %s3 = inlined_call_operand.hbm [shape: bf16[128,128], index: 3, kind: input, shape index: {}]
  %s4 = inlined_call_operand.vmem [shape: f32[1,128], index: 4, kind: input, shape index: {}]
  %s5 = inlined_call_operand.vmem [shape: f32[16,128], index: 5, kind: output, shape index: {}]
  %s6 = sld [smem:[#allocation0]]
  $region46: #{_mlp_forward.1} parent=0
    _
  %s8 = ssub.s32 1, %s6
  %s9 = scalar_select 0, %s8, %s6
  $region1: #{_mlp_forward.1} parent=0
    #allocation3 [shape = 'u8[32768]{0}', space=vmem, size = 0x8000, scoped, tag = 'input window, operand 1, single buffered']
    #allocation4 [shape = 's32[1]{0}', space=sflag, size = 0x4, scoped, tag = 'scoped memory for _mlp_forward.1']
    #allocation5 [shape = 'u8[32768]{0}', space=vmem, size = 0x8000, scoped, tag = 'input window, operand 3, single buffered']
    #allocation6 [shape = 's32[1]{0}', space=sflag, size = 0x4, scoped, tag = 'scoped memory for _mlp_forward.1']
    %10 = vsyncpa [#allocation4], 0
    %11 = vsyncpa [#allocation6], 0
    // Predicated region
    $region2: #{_mlp_forward.1} parent=1 // pred_check
      _
    $region3: #{_mlp_forward.1} parent=1 // pred_check_branch
      %13 = sbr.rel (0) target = $region5
    $region4: #{_mlp_forward.1} parent=1 // pred_region
      _
    $region5: #{_mlp_forward.1} parent=1 // pred_fallthru
      _
    // Predicated region
    $region6: #{_mlp_forward.1} parent=1 // pred_check
      _
    $region7: #{_mlp_forward.1} parent=1 // pred_check_branch
      %15 = sbr.rel (0) target = $region9
    $region8: #{_mlp_forward.1} parent=1 // pred_region
      %s17 = ssub.s32 1024, 1024
      %18 = vsyncadd [#allocation4], %s17
      %s19 = sshll.u32 [#allocation3], 4
      %s20 = int_to_ptr.vmem [resolvable:$true] %s19
      %25 = dma.hbm_to_vmem [thread:$0]  %s1, 1024, %s20, [#allocation4], 64, 64, 4
    $region9: #{_mlp_forward.1} parent=1 // pred_fallthru
      _
    // Predicated region
    $region10: #{_mlp_forward.1} parent=1 // pred_check
      _
    $region11: #{_mlp_forward.1} parent=1 // pred_check_branch
      %27 = sbr.rel (0) target = $region13
    $region12: #{_mlp_forward.1} parent=1 // pred_region
      _
    $region13: #{_mlp_forward.1} parent=1 // pred_fallthru
      _
    // Predicated region
    $region14: #{_mlp_forward.1} parent=1 // pred_check
      _
    $region15: #{_mlp_forward.1} parent=1 // pred_check_branch
      %29 = sbr.rel (0) target = $region17
    $region16: #{_mlp_forward.1} parent=1 // pred_region
      %s31 = ssub.s32 1024, 1024
      %32 = vsyncadd [#allocation6], %s31
      %s33 = sshll.u32 [#allocation5], 4
      %s34 = int_to_ptr.vmem [resolvable:$true] %s33
      %39 = dma.hbm_to_vmem [thread:$0]  %s3, 1024, %s34, [#allocation6], 64, 64, 4
    $region17: #{_mlp_forward.1} parent=1 // pred_fallthru
      _
    // Predicated region
    $region18: #{_mlp_forward.1} parent=1 // pred_check
      _
    $region19: #{_mlp_forward.1} parent=1 // pred_check_branch
      %41 = sbr.rel (0) target = $region21
    $region20: #{_mlp_forward.1} parent=1 // pred_region
      _
    $region21: #{_mlp_forward.1} parent=1 // pred_fallthru
      _
    // Predicated region
    $region22: #{_mlp_forward.1} parent=1 // pred_check
      _
    $region23: #{_mlp_forward.1} parent=1 // pred_check_branch
      %43 = sbr.rel (0) target = $region25
    $region24: #{_mlp_forward.1} parent=1 // pred_region
      %44 = dma.done [#allocation4], 1024
    $region25: #{_mlp_forward.1} parent=1 // pred_fallthru
      _
    // Predicated region
    $region26: #{_mlp_forward.1} parent=1 // pred_check
      _
    $region27: #{_mlp_forward.1} parent=1 // pred_check_branch
      %46 = sbr.rel (0) target = $region29
    $region28: #{_mlp_forward.1} parent=1 // pred_region
      %47 = dma.done [#allocation6], 1024
    $region29: #{_mlp_forward.1} parent=1 // pred_fallthru
      _
    %p49 = scmp.eq.s32.totalorder 0, 0
    // Predicated region
    $region30: #{_mlp_forward.1} parent=1 // pred_check
      %p50 = pneg %p49
    $region31: #{_mlp_forward.1} parent=1 // pred_check_branch
      %52 = sbr.rel (%p50) target = $region33
    $region32: #{_mlp_forward.1} parent=1 // pred_region
      %53 = vst [vmem:[#allocation2] sm:$0xff] 0.0
      %54 = vst [vmem:[#allocation2 + $0x8] sm:$0xff] 0.0
    $region33: #{_mlp_forward.1} parent=1 // pred_fallthru
      _
    %v55 = vld [vmem:[%s0] sm:$0xf]
    %v56 = vld [vmem:[%s0 + $0x4] sm:$0xf]
    %v57 = vld [vmem:[#allocation3] sm:$0xf]
    %v58 = vld [vmem:[#allocation3 + $0x4] sm:$0xf]
    %v59 = vld [vmem:[#allocation3 + $0x8] sm:$0xf]
    %v60 = vld [vmem:[#allocation3 + $0xc] sm:$0xf]
    %v61 = vld [vmem:[#allocation3 + $0x10] sm:$0xf]
    %v62 = vld [vmem:[#allocation3 + $0x14] sm:$0xf]
    %v63 = vld [vmem:[#allocation3 + $0x18] sm:$0xf]
    %v64 = vld [vmem:[#allocation3 + $0x1c] sm:$0xf]
    %v65 = vld [vmem:[#allocation3 + $0x20] sm:$0xf]
    %v66 = vld [vmem:[#allocation3 + $0x24] sm:$0xf]
    %v67 = vld [vmem:[#allocation3 + $0x28] sm:$0xf]
    %v68 = vld [vmem:[#allocation3 + $0x2c] sm:$0xf]
    %v69 = vld [vmem:[#allocation3 + $0x30] sm:$0xf]
    %v70 = vld [vmem:[#allocation3 + $0x34] sm:$0xf]
    %v71 = vld [vmem:[#allocation3 + $0x38] sm:$0xf]
    %v72 = vld [vmem:[#allocation3 + $0x3c] sm:$0xf]
    %v73 = vld [vmem:[%s2] sm:$0x1]
    %v75 = vlaneseq
    %v76 = vshrl.u32 %v75, 7
    %v77 = vsub.s32 0, %v76
    %v78 = vrot.slane %v73, %v77
    %v82 = vunpack.c.l.b16 %v55
    %v83 = vunpack.c.l.b16 %v56
    %v84 = vpack.c.b16 %v83, %v82
    %v102 = vunpack.c.l.b16 %v57
    %v103 = vunpack.c.l.b16 %v58
    %v104 = vunpack.c.l.b16 %v59
    %v105 = vunpack.c.l.b16 %v60
    %v106 = vunpack.c.l.b16 %v61
    %v107 = vunpack.c.l.b16 %v62
    %v108 = vunpack.c.l.b16 %v63
    %v109 = vunpack.c.l.b16 %v64
    %v110 = vunpack.c.l.b16 %v65
    %v111 = vunpack.c.l.b16 %v66
    %v112 = vunpack.c.l.b16 %v67
    %v113 = vunpack.c.l.b16 %v68
    %v114 = vunpack.c.l.b16 %v69
    %v115 = vunpack.c.l.b16 %v70
    %v116 = vunpack.c.l.b16 %v71
    %v117 = vunpack.c.l.b16 %v72
    %v118 = vpack.c.b16 %v103, %v102
    %v119 = vpack.c.b16 %v105, %v104
    %v120 = vpack.c.b16 %v107, %v106
    %v121 = vpack.c.b16 %v109, %v108
    %v122 = vpack.c.b16 %v111, %v110
    %v123 = vpack.c.b16 %v113, %v112
    %v124 = vpack.c.b16 %v115, %v114
    %v125 = vpack.c.b16 %v117, %v116
    %134 = vmatprep.subr.bf16.mxu0 0
    %135 = vmatpush1.bf16.msra.mxu0 %v125
    %136 = vmatprep.subr.bf16.mxu0 0
    %137 = vmatpush1.bf16.msra.mxu0 %v124
    %138 = vmatprep.subr.bf16.mxu0 0
    %139 = vmatpush1.bf16.msra.mxu0 %v123
    %140 = vmatprep.subr.bf16.mxu0 0
    %141 = vmatpush1.bf16.msra.mxu0 %v122
    %142 = vmatprep.subr.bf16.mxu0 0
    %143 = vmatpush1.bf16.msra.mxu0 %v121
    %144 = vmatprep.subr.bf16.mxu0 0
    %145 = vmatpush1.bf16.msra.mxu0 %v120
    %146 = vmatprep.subr.bf16.mxu0 0
    %147 = vmatpush1.bf16.msra.mxu0 %v119
    %148 = vmatprep.subr.bf16.mxu0 0
    %149 = vmatpush1.bf16.msra.mxu0 %v118
    %150 = vmatprep.subr.bf16.mxu0 0
    %151 = vmatpush2.bf16.msra.mxu0 0
    %152 = vmatprep.subr.bf16.mxu0 0
    %153 = vmatpush2.bf16.msra.mxu0 0
    %154 = vmatprep.subr.bf16.mxu0 0
    %155 = vmatpush2.bf16.msra.mxu0 0
    %156 = vmatprep.subr.bf16.mxu0 0
    %157 = vmatpush2.bf16.msra.mxu0 0
    %158 = vmatprep.subr.bf16.mxu0 0
    %159 = vmatpush2.bf16.msra.mxu0 0
    %160 = vmatprep.subr.bf16.mxu0 0
    %161 = vmatpush2.bf16.msra.mxu0 0
    %162 = vmatprep.subr.bf16.mxu0 0
    %163 = vmatpush2.bf16.msra.mxu0 0
    %164 = vmatprep.subr.bf16.mxu0 0
    %165 = vmatpush2.bf16.msra.mxu0 0
    %166 = vmatprep.mubr.bf16.mxu0 0
    %167 = vmatmul.mubr.bf16.gmra.mxu0 %v84
    %v168 = vpop.f32.mrf.mxu0
    %v169 = vadd.f32 %v78, %v168
    %v170 = vpop.f32.mrf.mxu0
    %v171 = vpop.f32.mrf.mxu0
    %v172 = vadd.f32 %v78, %v171
    %v173 = vpop.f32.mrf.mxu0
    %174 = vdwg.mxu0
    %v175 = vmax.f32 %v169, 0.0
    %v176 = vmax.f32 %v172, 0.0
    %v177 = vld [vmem:[#allocation2] sm:$0xff]
    %v178 = vld [vmem:[#allocation2 + $0x8] sm:$0xff]
    %v179 = vpack.c.bf16 %v176, %v175
    %v180 = vld [vmem:[#allocation5] sm:$0xf]
    %v181 = vld [vmem:[#allocation5 + $0x4] sm:$0xf]
    %v182 = vld [vmem:[#allocation5 + $0x8] sm:$0xf]
    %v183 = vld [vmem:[#allocation5 + $0xc] sm:$0xf]
    %v184 = vld [vmem:[#allocation5 + $0x10] sm:$0xf]
    %v185 = vld [vmem:[#allocation5 + $0x14] sm:$0xf]
    %v186 = vld [vmem:[#allocation5 + $0x18] sm:$0xf]
    %v187 = vld [vmem:[#allocation5 + $0x1c] sm:$0xf]
    %v188 = vld [vmem:[#allocation5 + $0x20] sm:$0xf]
    %v189 = vld [vmem:[#allocation5 + $0x24] sm:$0xf]
    %v190 = vld [vmem:[#allocation5 + $0x28] sm:$0xf]
    %v191 = vld [vmem:[#allocation5 + $0x2c] sm:$0xf]
    %v192 = vld [vmem:[#allocation5 + $0x30] sm:$0xf]
    %v193 = vld [vmem:[#allocation5 + $0x34] sm:$0xf]
    %v194 = vld [vmem:[#allocation5 + $0x38] sm:$0xf]
    %v195 = vld [vmem:[#allocation5 + $0x3c] sm:$0xf]
    %v212 = vunpack.c.l.b16 %v180
    %v213 = vunpack.c.l.b16 %v181
    %v214 = vunpack.c.l.b16 %v182
    %v215 = vunpack.c.l.b16 %v183
    %v216 = vunpack.c.l.b16 %v184
    %v217 = vunpack.c.l.b16 %v185
    %v218 = vunpack.c.l.b16 %v186
    %v219 = vunpack.c.l.b16 %v187
    %v220 = vunpack.c.l.b16 %v188
    %v221 = vunpack.c.l.b16 %v189
    %v222 = vunpack.c.l.b16 %v190
    %v223 = vunpack.c.l.b16 %v191
    %v224 = vunpack.c.l.b16 %v192
    %v225 = vunpack.c.l.b16 %v193
    %v226 = vunpack.c.l.b16 %v194
    %v227 = vunpack.c.l.b16 %v195
    %v228 = vpack.c.b16 %v213, %v212
    %v229 = vpack.c.b16 %v215, %v214
    %v230 = vpack.c.b16 %v217, %v216
    %v231 = vpack.c.b16 %v219, %v218
    %v232 = vpack.c.b16 %v221, %v220
    %v233 = vpack.c.b16 %v223, %v222
    %v234 = vpack.c.b16 %v225, %v224
    %v235 = vpack.c.b16 %v227, %v226
    %244 = vmatprep.subr.bf16.mxu0 0
    %245 = vmatpush1.bf16.msra.mxu0 %v235
    %246 = vmatprep.subr.bf16.mxu0 0
    %247 = vmatpush1.bf16.msra.mxu0 %v234
    %248 = vmatprep.subr.bf16.mxu0 0
    %249 = vmatpush1.bf16.msra.mxu0 %v233
    %250 = vmatprep.subr.bf16.mxu0 0
    %251 = vmatpush1.bf16.msra.mxu0 %v232
    %252 = vmatprep.subr.bf16.mxu0 0
    %253 = vmatpush1.bf16.msra.mxu0 %v231
    %254 = vmatprep.subr.bf16.mxu0 0
    %255 = vmatpush1.bf16.msra.mxu0 %v230
    %256 = vmatprep.subr.bf16.mxu0 0
    %257 = vmatpush1.bf16.msra.mxu0 %v229
    %258 = vmatprep.subr.bf16.mxu0 0
    %259 = vmatpush1.bf16.msra.mxu0 %v228
    %260 = vmatprep.subr.bf16.mxu0 0
    %261 = vmatpush2.bf16.msra.mxu0 0
    %262 = vmatprep.subr.bf16.mxu0 0
    %263 = vmatpush2.bf16.msra.mxu0 0
    %264 = vmatprep.subr.bf16.mxu0 0
    %265 = vmatpush2.bf16.msra.mxu0 0
    %266 = vmatprep.subr.bf16.mxu0 0
    %267 = vmatpush2.bf16.msra.mxu0 0
    %268 = vmatprep.subr.bf16.mxu0 0
    %269 = vmatpush2.bf16.msra.mxu0 0
    %270 = vmatprep.subr.bf16.mxu0 0
    %271 = vmatpush2.bf16.msra.mxu0 0
    %272 = vmatprep.subr.bf16.mxu0 0
    %273 = vmatpush2.bf16.msra.mxu0 0
    %274 = vmatprep.subr.bf16.mxu0 0
    %275 = vmatpush2.bf16.msra.mxu0 0
    %276 = vmatprep.mubr.bf16.mxu0 0
    %277 = vmatmul.mubr.bf16.gmra.mxu0 %v179
    %v278 = vpop.f32.mrf.mxu0
    %v279 = vadd.f32 0.0, %v278
    %v280 = vpop.f32.mrf.mxu0
    %v281 = vpop.f32.mrf.mxu0
    %v282 = vadd.f32 0.0, %v281
    %v283 = vpop.f32.mrf.mxu0
    %284 = vdwg.mxu0
    %v285 = vadd.f32 %v177, %v279
    %v286 = vadd.f32 %v178, %v282
    %287 = vst [vmem:[#allocation2] sm:$0xff] %v285
    %288 = vst [vmem:[#allocation2 + $0x8] sm:$0xff] %v286
    // Predicated region
    $region34: #{_mlp_forward.1} parent=1 // pred_check
      %p289 = pneg %p49
    $region35: #{_mlp_forward.1} parent=1 // pred_check_branch
      %291 = sbr.rel (%p289) target = $region37
    $region36: #{_mlp_forward.1} parent=1 // pred_region
      %v292 = vld [vmem:[#allocation2] sm:$0xff]
      %v293 = vld [vmem:[#allocation2 + $0x8] sm:$0xff]
      %v294 = vld [vmem:[%s4] sm:$0x1]
      %v296 = vlaneseq
      %v297 = vshrl.u32 %v296, 7
      %v298 = vsub.s32 0, %v297
      %v299 = vrot.slane %v294, %v298
      %v301 = vadd.f32 %v292, %v299
      %v302 = vadd.f32 %v293, %v299
      %303 = vst [vmem:[%s5] sm:$0xff] %v301
      %304 = vst [vmem:[%s5 + $0x8] sm:$0xff] %v302
    $region37: #{_mlp_forward.1} parent=1 // pred_fallthru
      _
    // Predicated region
    $region38: #{_mlp_forward.1} parent=1 // pred_check
      _
    $region39: #{_mlp_forward.1} parent=1 // pred_check_branch
      %306 = sbr.rel (0) target = $region41
    $region40: #{_mlp_forward.1} parent=1 // pred_region
      _
    $region41: #{_mlp_forward.1} parent=1 // pred_fallthru
      _
    // Predicated region
    $region42: #{_mlp_forward.1} parent=1 // pred_check
      _
    $region43: #{_mlp_forward.1} parent=1 // pred_check_branch
      %308 = sbr.rel (0) target = $region45
    $region44: #{_mlp_forward.1} parent=1 // pred_region
      _
    $region45: #{_mlp_forward.1} parent=1 // pred_fallthru
      _
    %309 = vsyncpa [#allocation4], 1
    %310 = vsyncpa [#allocation6], 1

</llo_original>
